<compile_context>
chip_gen: v6e
topology: v6e:2x2x1
jax: 0.10.0
libtpu: 0.0.40
codegen_flags: <defaults>
</compile_context>

<pallas_src>
import math

import jax
import jax.numpy as jnp
from jax import lax
from jax.experimental import pallas as pl
from jax.experimental.pallas import tpu as pltpu


def _largest_divisor_at_most(n, cap):
    cap = max(1, min(n, cap))
    for d in range(cap, 0, -1):
        if n % d == 0:
            return d
    return 1


def _vmem_budget_bytes():
    """Generation-aware VMEM budget (v5e/v6e: 128 MiB physical, v7x: 64 MiB)."""
    try:
        cap = int(pltpu.get_tpu_info().vmem_capacity_bytes)
    except Exception:  # conservative (v7x-sized) fallback
        cap = 64 * 1024 * 1024
    return cap // 4  # headroom for double buffers / compiler scratch


def _strips_per_block(total_strips, p, nw, emb, x_itemsize, vmem_budget):
    """How many patch-row 'strips' each grid step processes (the M tile)."""
    # Double-buffered input + output block, with a 4x margin for (8,128)
    # tile padding of the small minor dims.
    bytes_per_strip = 4 * 2 * (p * nw * p * x_itemsize + nw * emb * 4)
    max_by_vmem = max(1, vmem_budget // max(1, bytes_per_strip))
    max_by_rows = max(1, 512 // max(1, nw))    # ~512-row M tile (measured sweet spot)
    max_by_unroll = max(1, 256 // max(1, p))   # bound the static in-kernel unroll
    cap = min(max_by_vmem, max_by_rows, max_by_unroll, total_strips)
    if total_strips >= 2:
        # Keep >= 2 grid steps: enables DMA/compute double-buffering and lets
        # v7x shard the "parallel" grid axis across its 2 TensorCores.
        cap = min(cap, total_strips // 2)
    return _largest_divisor_at_most(total_strips, cap)


def image_embedding_forward(x, weight, bias, *, img_size, patch_size):
    """Equivalent of ImageEmbedding.forward.

    x:      (B, C, H, W) with H == W == img_size and C == 1
    weight: (embedding_dim, patch_size * patch_size)  (PyTorch Linear layout)
    bias:   (embedding_dim,)
    returns (B, num_patches, embedding_dim)
    """
    B, C, H, W = x.shape
    assert H == img_size and W == img_size, (
        f"Input image size ({H}x{W}) doesn't match model ({img_size}x{img_size})."
    )
    assert C == 1, "Linear in_features = patch_size**2, so forward requires C == 1."
    p = patch_size
    assert H % p == 0 and W % p == 0, "img_size must be divisible by patch_size."
    nh, nw = H // p, W // p
    num_patches = nh * nw
    emb = weight.shape[0]
    assert weight.shape[1] == p * p, "Linear in_features mismatch."

    # ---- zero-copy input view: patch extraction folded into the kernel DMAs ----
    # (B, 1, H, W) -> (B*nh, p, nw, p) is a pure row-major dim split/merge (no
    # HBM data movement); x_strips[s, a, j, c] == x[b, 0, r*p + a, j*p + c]
    # with s = b*nh + r.
    total_strips = B * nh
    x_strips = x.reshape(total_strips, p, nw, p)

    # ---- tiny, one-off weight/bias reshuffle (constant-foldable) ----
    # wr[a, c, e] = weight[e, a*p + c]; bf16 MXU operands, f32 accumulation.
    wr = jnp.transpose(weight.reshape(emb, p, p), (1, 2, 0)).astype(jnp.bfloat16)
    b2 = bias.reshape(1, emb).astype(jnp.float32)

    st = _strips_per_block(total_strips, p, nw, emb,
                           x.dtype.itemsize, _vmem_budget_bytes())
    grid = (total_strips // st,)

    def kernel(x_ref, w_ref, b_ref, o_ref):
        # x_ref: (st, p, nw, p)  raw image rows (one patch-row per [s, a] slice)
        # w_ref: (p, p, emb)     bf16, VMEM-resident across the whole grid
        # b_ref: (1, emb)        f32
        # o_ref: (st, nw, emb)
        bias_vec = b_ref[...]
        for s in range(st):                      # static unroll over strips
            acc = None
            for a in range(p):                   # K split over patch rows
                part = lax.dot_general(
                    x_ref[s, a].astype(jnp.bfloat16),     # (nw, p)
                    w_ref[a],                              # (p, emb)
                    dimension_numbers=(((1,), (0,)), ((), ())),
                    preferred_element_type=jnp.float32)
                acc = part if acc is None else acc + part
            o_ref[s] = (acc + bias_vec).astype(o_ref.dtype)

    # Only raise the scoped-VMEM limit when the blocks actually need it.
    x_blk_bytes = st * p * nw * p * x.dtype.itemsize
    o_blk_bytes = st * nw * emb * x.dtype.itemsize
    approx_need = 4 * 2 * (x_blk_bytes + o_blk_bytes) + wr.size * 2 + emb * 4
    compiler_kwargs = dict(dimension_semantics=("parallel",))
    if approx_need > 16 * 1024 * 1024:
        compiler_kwargs["vmem_limit_bytes"] = int(
            min(2 * approx_need, 2 * _vmem_budget_bytes()))

    out = pl.pallas_call(
        kernel,
        out_shape=jax.ShapeDtypeStruct((total_strips, nw, emb), x.dtype),
        grid_spec=pltpu.PrefetchScalarGridSpec(
            num_scalar_prefetch=0,
            grid=grid,
            in_specs=[
                pl.BlockSpec((st, p, nw, p), lambda i: (i, 0, 0, 0)),
                pl.BlockSpec((p, p, emb), lambda i: (0, 0, 0)),
                pl.BlockSpec((1, emb), lambda i: (0, 0)),
            ],
            out_specs=pl.BlockSpec((st, nw, emb), lambda i: (i, 0, 0)),
        ),
        compiler_params=pltpu.CompilerParams(**compiler_kwargs),
    )(x_strips, wr, b2)

    # (B*nh, nw, emb) -> (B, nh*nw, emb): free row-major reshape; patch index
    # r*nw + j matches PyTorch's unfold/unfold/view/permute ordering.
    return out.reshape(B, num_patches, emb)


if __name__ == "__main__":
    # Small shapes consistent with the module (C must be 1 for the Linear).
    img_size = 16
    patch_size = 8
    embedding_dim = 32
    B, C = 2, 1
    feat = patch_size * patch_size                 # 64
    num_patches = (img_size // patch_size) ** 2    # 4

    key = jax.random.PRNGKey(0)
    kx, kw, kb = jax.random.split(key, 3)

    # Deterministic Linear init (PyTorch-style uniform bound).
    bound = 1.0 / math.sqrt(feat)
    weight = jax.random.uniform(kw, (embedding_dim, feat), jnp.float32, -bound, bound)
    bias = jax.random.uniform(kb, (embedding_dim,), jnp.float32, -bound, bound)
    x = jax.random.normal(kx, (B, C, img_size, img_size), jnp.float32)

    out = image_embedding_forward(
        x, weight, bias, img_size=img_size, patch_size=patch_size)
    out = jax.block_until_ready(out)
    assert out.shape == (B, num_patches, embedding_dim)

    # Pure-JAX f32 reference of the same forward semantics.
    nh = nw = img_size // patch_size
    xp = x.reshape(B, C, nh, patch_size, nw, patch_size)
    xp = xp.transpose(0, 1, 2, 4, 3, 5).reshape(B, C, num_patches,
                                                patch_size, patch_size)
    xp = xp.transpose(0, 2, 3, 4, 1).reshape(B, num_patches, -1)
    ref = xp @ weight.T + bias

    # bf16 MXU operands with f32 accumulation -> modest tolerance.
    assert jnp.allclose(out, ref, atol=2e-2, rtol=2e-2), (
        float(jnp.max(jnp.abs(out - ref))))

    print("KERNEL_OK")
</pallas_src>

<mosaic_0001>
module attributes {stable_mosaic.version = 11 : i64} {
  func.func @kernel(%arg0: i32, %arg1: memref<2x8x2x8xf32, #tpu.memory_space<vmem>>, %arg2: memref<8x8x32xbf16, #tpu.memory_space<vmem>>, %arg3: memref<1x32xf32, #tpu.memory_space<vmem>>, %arg4: memref<2x2x32xf32, #tpu.memory_space<vmem>>) attributes {dimension_semantics = [#tpu.dimension_semantics<parallel>], iteration_bounds = array<i64: 2>, scalar_prefetch = 0 : i64, scratch_operands = 0 : i64, tpu.core_type = #tpu.core_type<tc>, window_params = [{transform_indices = @transform_0, window_bounds = array<i64: 2, 8, 2, 8>}, {pipeline_mode = #tpu.pipeline_mode<synchronous>, transform_indices = @transform_1, window_bounds = array<i64: 8, 8, 32>}, {pipeline_mode = #tpu.pipeline_mode<synchronous>, transform_indices = @transform_2, window_bounds = array<i64: 1, 32>}, {transform_indices = @transform_3, window_bounds = array<i64: 2, 2, 32>}]} {
    %c0 = arith.constant 0 : index
    %c0_0 = arith.constant 0 : index
    %0 = vector.load %arg3[%c0, %c0_0] : memref<1x32xf32, #tpu.memory_space<vmem>>, vector<1x32xf32>
    %c0_1 = arith.constant 0 : index
    %c0_2 = arith.constant 0 : index
    %c0_3 = arith.constant 0 : index
    %c0_4 = arith.constant 0 : index
    %1 = vector.load %arg1[%c0_1, %c0_2, %c0_3, %c0_4] : memref<2x8x2x8xf32, #tpu.memory_space<vmem>>, vector<1x1x2x8xf32>
    %2 = vector.shape_cast %1 : vector<1x1x2x8xf32> to vector<2x8xf32>
    %3 = arith.truncf %2 : vector<2x8xf32> to vector<2x8xbf16>
    %c0_5 = arith.constant 0 : index
    %c0_6 = arith.constant 0 : index
    %c0_7 = arith.constant 0 : index
    %4 = vector.load %arg2[%c0_5, %c0_6, %c0_7] : memref<8x8x32xbf16, #tpu.memory_space<vmem>>, vector<1x8x32xbf16>
    %5 = vector.shape_cast %4 : vector<1x8x32xbf16> to vector<8x32xbf16>
    %cst = arith.constant dense<0.000000e+00> : vector<2x32xf32>
    %6 = tpu.matmul %3, %5, %cst {dimension_numbers = #tpu.dot_dimension_numbers<[1], [0], [0], [1], [0, 0, 1, 1], [], []>} : vector<2x8xbf16>, vector<8x32xbf16>, vector<2x32xf32> -> vector<2x32xf32>
    %c0_8 = arith.constant 0 : index
    %c1 = arith.constant 1 : index
    %c0_9 = arith.constant 0 : index
    %c0_10 = arith.constant 0 : index
    %7 = vector.load %arg1[%c0_8, %c1, %c0_9, %c0_10] : memref<2x8x2x8xf32, #tpu.memory_space<vmem>>, vector<1x1x2x8xf32>
    %8 = vector.shape_cast %7 : vector<1x1x2x8xf32> to vector<2x8xf32>
    %9 = arith.truncf %8 : vector<2x8xf32> to vector<2x8xbf16>
    %c1_11 = arith.constant 1 : index
    %c0_12 = arith.constant 0 : index
    %c0_13 = arith.constant 0 : index
    %10 = vector.load %arg2[%c1_11, %c0_12, %c0_13] : memref<8x8x32xbf16, #tpu.memory_space<vmem>>, vector<1x8x32xbf16>
    %11 = vector.shape_cast %10 : vector<1x8x32xbf16> to vector<8x32xbf16>
    %cst_14 = arith.constant dense<0.000000e+00> : vector<2x32xf32>
    %12 = tpu.matmul %9, %11, %cst_14 {dimension_numbers = #tpu.dot_dimension_numbers<[1], [0], [0], [1], [0, 0, 1, 1], [], []>} : vector<2x8xbf16>, vector<8x32xbf16>, vector<2x32xf32> -> vector<2x32xf32>
    %13 = arith.addf %6, %12 : vector<2x32xf32>
    %c0_15 = arith.constant 0 : index
    %c2 = arith.constant 2 : index
    %c0_16 = arith.constant 0 : index
    %c0_17 = arith.constant 0 : index
    %14 = vector.load %arg1[%c0_15, %c2, %c0_16, %c0_17] : memref<2x8x2x8xf32, #tpu.memory_space<vmem>>, vector<1x1x2x8xf32>
    %15 = vector.shape_cast %14 : vector<1x1x2x8xf32> to vector<2x8xf32>
    %16 = arith.truncf %15 : vector<2x8xf32> to vector<2x8xbf16>
    %c2_18 = arith.constant 2 : index
    %c0_19 = arith.constant 0 : index
    %c0_20 = arith.constant 0 : index
    %17 = vector.load %arg2[%c2_18, %c0_19, %c0_20] : memref<8x8x32xbf16, #tpu.memory_space<vmem>>, vector<1x8x32xbf16>
    %18 = vector.shape_cast %17 : vector<1x8x32xbf16> to vector<8x32xbf16>
    %cst_21 = arith.constant dense<0.000000e+00> : vector<2x32xf32>
    %19 = tpu.matmul %16, %18, %cst_21 {dimension_numbers = #tpu.dot_dimension_numbers<[1], [0], [0], [1], [0, 0, 1, 1], [], []>} : vector<2x8xbf16>, vector<8x32xbf16>, vector<2x32xf32> -> vector<2x32xf32>
    %20 = arith.addf %13, %19 : vector<2x32xf32>
    %c0_22 = arith.constant 0 : index
    %c3 = arith.constant 3 : index
    %c0_23 = arith.constant 0 : index
    %c0_24 = arith.constant 0 : index
    %21 = vector.load %arg1[%c0_22, %c3, %c0_23, %c0_24] : memref<2x8x2x8xf32, #tpu.memory_space<vmem>>, vector<1x1x2x8xf32>
    %22 = vector.shape_cast %21 : vector<1x1x2x8xf32> to vector<2x8xf32>
    %23 = arith.truncf %22 : vector<2x8xf32> to vector<2x8xbf16>
    %c3_25 = arith.constant 3 : index
    %c0_26 = arith.constant 0 : index
    %c0_27 = arith.constant 0 : index
    %24 = vector.load %arg2[%c3_25, %c0_26, %c0_27] : memref<8x8x32xbf16, #tpu.memory_space<vmem>>, vector<1x8x32xbf16>
    %25 = vector.shape_cast %24 : vector<1x8x32xbf16> to vector<8x32xbf16>
    %cst_28 = arith.constant dense<0.000000e+00> : vector<2x32xf32>
    %26 = tpu.matmul %23, %25, %cst_28 {dimension_numbers = #tpu.dot_dimension_numbers<[1], [0], [0], [1], [0, 0, 1, 1], [], []>} : vector<2x8xbf16>, vector<8x32xbf16>, vector<2x32xf32> -> vector<2x32xf32>
    %27 = arith.addf %20, %26 : vector<2x32xf32>
    %c0_29 = arith.constant 0 : index
    %c4 = arith.constant 4 : index
    %c0_30 = arith.constant 0 : index
    %c0_31 = arith.constant 0 : index
    %28 = vector.load %arg1[%c0_29, %c4, %c0_30, %c0_31] : memref<2x8x2x8xf32, #tpu.memory_space<vmem>>, vector<1x1x2x8xf32>
    %29 = vector.shape_cast %28 : vector<1x1x2x8xf32> to vector<2x8xf32>
    %30 = arith.truncf %29 : vector<2x8xf32> to vector<2x8xbf16>
    %c4_32 = arith.constant 4 : index
    %c0_33 = arith.constant 0 : index
    %c0_34 = arith.constant 0 : index
    %31 = vector.load %arg2[%c4_32, %c0_33, %c0_34] : memref<8x8x32xbf16, #tpu.memory_space<vmem>>, vector<1x8x32xbf16>
    %32 = vector.shape_cast %31 : vector<1x8x32xbf16> to vector<8x32xbf16>
    %cst_35 = arith.constant dense<0.000000e+00> : vector<2x32xf32>
    %33 = tpu.matmul %30, %32, %cst_35 {dimension_numbers = #tpu.dot_dimension_numbers<[1], [0], [0], [1], [0, 0, 1, 1], [], []>} : vector<2x8xbf16>, vector<8x32xbf16>, vector<2x32xf32> -> vector<2x32xf32>
    %34 = arith.addf %27, %33 : vector<2x32xf32>
    %c0_36 = arith.constant 0 : index
    %c5 = arith.constant 5 : index
    %c0_37 = arith.constant 0 : index
    %c0_38 = arith.constant 0 : index
    %35 = vector.load %arg1[%c0_36, %c5, %c0_37, %c0_38] : memref<2x8x2x8xf32, #tpu.memory_space<vmem>>, vector<1x1x2x8xf32>
    %36 = vector.shape_cast %35 : vector<1x1x2x8xf32> to vector<2x8xf32>
    %37 = arith.truncf %36 : vector<2x8xf32> to vector<2x8xbf16>
    %c5_39 = arith.constant 5 : index
    %c0_40 = arith.constant 0 : index
    %c0_41 = arith.constant 0 : index
    %38 = vector.load %arg2[%c5_39, %c0_40, %c0_41] : memref<8x8x32xbf16, #tpu.memory_space<vmem>>, vector<1x8x32xbf16>
    %39 = vector.shape_cast %38 : vector<1x8x32xbf16> to vector<8x32xbf16>
    %cst_42 = arith.constant dense<0.000000e+00> : vector<2x32xf32>
    %40 = tpu.matmul %37, %39, %cst_42 {dimension_numbers = #tpu.dot_dimension_numbers<[1], [0], [0], [1], [0, 0, 1, 1], [], []>} : vector<2x8xbf16>, vector<8x32xbf16>, vector<2x32xf32> -> vector<2x32xf32>
    %41 = arith.addf %34, %40 : vector<2x32xf32>
    %c0_43 = arith.constant 0 : index
    %c6 = arith.constant 6 : index
    %c0_44 = arith.constant 0 : index
    %c0_45 = arith.constant 0 : index
    %42 = vector.load %arg1[%c0_43, %c6, %c0_44, %c0_45] : memref<2x8x2x8xf32, #tpu.memory_space<vmem>>, vector<1x1x2x8xf32>
    %43 = vector.shape_cast %42 : vector<1x1x2x8xf32> to vector<2x8xf32>
    %44 = arith.truncf %43 : vector<2x8xf32> to vector<2x8xbf16>
    %c6_46 = arith.constant 6 : index
    %c0_47 = arith.constant 0 : index
    %c0_48 = arith.constant 0 : index
    %45 = vector.load %arg2[%c6_46, %c0_47, %c0_48] : memref<8x8x32xbf16, #tpu.memory_space<vmem>>, vector<1x8x32xbf16>
    %46 = vector.shape_cast %45 : vector<1x8x32xbf16> to vector<8x32xbf16>
    %cst_49 = arith.constant dense<0.000000e+00> : vector<2x32xf32>
    %47 = tpu.matmul %44, %46, %cst_49 {dimension_numbers = #tpu.dot_dimension_numbers<[1], [0], [0], [1], [0, 0, 1, 1], [], []>} : vector<2x8xbf16>, vector<8x32xbf16>, vector<2x32xf32> -> vector<2x32xf32>
    %48 = arith.addf %41, %47 : vector<2x32xf32>
    %c0_50 = arith.constant 0 : index
    %c7 = arith.constant 7 : index
    %c0_51 = arith.constant 0 : index
    %c0_52 = arith.constant 0 : index
    %49 = vector.load %arg1[%c0_50, %c7, %c0_51, %c0_52] : memref<2x8x2x8xf32, #tpu.memory_space<vmem>>, vector<1x1x2x8xf32>
    %50 = vector.shape_cast %49 : vector<1x1x2x8xf32> to vector<2x8xf32>
    %51 = arith.truncf %50 : vector<2x8xf32> to vector<2x8xbf16>
    %c7_53 = arith.constant 7 : index
    %c0_54 = arith.constant 0 : index
    %c0_55 = arith.constant 0 : index
    %52 = vector.load %arg2[%c7_53, %c0_54, %c0_55] : memref<8x8x32xbf16, #tpu.memory_space<vmem>>, vector<1x8x32xbf16>
    %53 = vector.shape_cast %52 : vector<1x8x32xbf16> to vector<8x32xbf16>
    %cst_56 = arith.constant dense<0.000000e+00> : vector<2x32xf32>
    %54 = tpu.matmul %51, %53, %cst_56 {dimension_numbers = #tpu.dot_dimension_numbers<[1], [0], [0], [1], [0, 0, 1, 1], [], []>} : vector<2x8xbf16>, vector<8x32xbf16>, vector<2x32xf32> -> vector<2x32xf32>
    %55 = arith.addf %48, %54 : vector<2x32xf32>
    %56 = vector.broadcast %0 : vector<1x32xf32> to vector<2x32xf32>
    %57 = arith.addf %55, %56 : vector<2x32xf32>
    %c0_57 = arith.constant 0 : index
    %c0_58 = arith.constant 0 : index
    %c0_59 = arith.constant 0 : index
    %58 = vector.load %arg4[%c0_57, %c0_58, %c0_59] : memref<2x2x32xf32, #tpu.memory_space<vmem>>, vector<1x2x32xf32>
    %59 = vector.shape_cast %58 : vector<1x2x32xf32> to vector<2x32xf32>
    %60 = vector.shape_cast %57 : vector<2x32xf32> to vector<1x2x32xf32>
    tpu.vector_store %arg4[%c0_57, %c0_58, %c0_59], %60 {strides = array<i32>} : memref<2x2x32xf32, #tpu.memory_space<vmem>>, vector<1x2x32xf32>,
    %c1_60 = arith.constant 1 : index
    %c0_61 = arith.constant 0 : index
    %c0_62 = arith.constant 0 : index
    %c0_63 = arith.constant 0 : index
    %61 = vector.load %arg1[%c1_60, %c0_61, %c0_62, %c0_63] : memref<2x8x2x8xf32, #tpu.memory_space<vmem>>, vector<1x1x2x8xf32>
    %62 = vector.shape_cast %61 : vector<1x1x2x8xf32> to vector<2x8xf32>
    %63 = arith.truncf %62 : vector<2x8xf32> to vector<2x8xbf16>
    %c0_64 = arith.constant 0 : index
    %c0_65 = arith.constant 0 : index
    %c0_66 = arith.constant 0 : index
    %64 = vector.load %arg2[%c0_64, %c0_65, %c0_66] : memref<8x8x32xbf16, #tpu.memory_space<vmem>>, vector<1x8x32xbf16>
    %65 = vector.shape_cast %64 : vector<1x8x32xbf16> to vector<8x32xbf16>
    %cst_67 = arith.constant dense<0.000000e+00> : vector<2x32xf32>
    %66 = tpu.matmul %63, %65, %cst_67 {dimension_numbers = #tpu.dot_dimension_numbers<[1], [0], [0], [1], [0, 0, 1, 1], [], []>} : vector<2x8xbf16>, vector<8x32xbf16>, vector<2x32xf32> -> vector<2x32xf32>
    %c1_68 = arith.constant 1 : index
    %c1_69 = arith.constant 1 : index
    %c0_70 = arith.constant 0 : index
    %c0_71 = arith.constant 0 : index
    %67 = vector.load %arg1[%c1_68, %c1_69, %c0_70, %c0_71] : memref<2x8x2x8xf32, #tpu.memory_space<vmem>>, vector<1x1x2x8xf32>
    %68 = vector.shape_cast %67 : vector<1x1x2x8xf32> to vector<2x8xf32>
    %69 = arith.truncf %68 : vector<2x8xf32> to vector<2x8xbf16>
    %c1_72 = arith.constant 1 : index
    %c0_73 = arith.constant 0 : index
    %c0_74 = arith.constant 0 : index
    %70 = vector.load %arg2[%c1_72, %c0_73, %c0_74] : memref<8x8x32xbf16, #tpu.memory_space<vmem>>, vector<1x8x32xbf16>
    %71 = vector.shape_cast %70 : vector<1x8x32xbf16> to vector<8x32xbf16>
    %cst_75 = arith.constant dense<0.000000e+00> : vector<2x32xf32>
    %72 = tpu.matmul %69, %71, %cst_75 {dimension_numbers = #tpu.dot_dimension_numbers<[1], [0], [0], [1], [0, 0, 1, 1], [], []>} : vector<2x8xbf16>, vector<8x32xbf16>, vector<2x32xf32> -> vector<2x32xf32>
    %73 = arith.addf %66, %72 : vector<2x32xf32>
    %c1_76 = arith.constant 1 : index
    %c2_77 = arith.constant 2 : index
    %c0_78 = arith.constant 0 : index
    %c0_79 = arith.constant 0 : index
    %74 = vector.load %arg1[%c1_76, %c2_77, %c0_78, %c0_79] : memref<2x8x2x8xf32, #tpu.memory_space<vmem>>, vector<1x1x2x8xf32>
    %75 = vector.shape_cast %74 : vector<1x1x2x8xf32> to vector<2x8xf32>
    %76 = arith.truncf %75 : vector<2x8xf32> to vector<2x8xbf16>
    %c2_80 = arith.constant 2 : index
    %c0_81 = arith.constant 0 : index
    %c0_82 = arith.constant 0 : index
    %77 = vector.load %arg2[%c2_80, %c0_81, %c0_82] : memref<8x8x32xbf16, #tpu.memory_space<vmem>>, vector<1x8x32xbf16>
    %78 = vector.shape_cast %77 : vector<1x8x32xbf16> to vector<8x32xbf16>
    %cst_83 = arith.constant dense<0.000000e+00> : vector<2x32xf32>
    %79 = tpu.matmul %76, %78, %cst_83 {dimension_numbers = #tpu.dot_dimension_numbers<[1], [0], [0], [1], [0, 0, 1, 1], [], []>} : vector<2x8xbf16>, vector<8x32xbf16>, vector<2x32xf32> -> vector<2x32xf32>
    %80 = arith.addf %73, %79 : vector<2x32xf32>
    %c1_84 = arith.constant 1 : index
    %c3_85 = arith.constant 3 : index
    %c0_86 = arith.constant 0 : index
    %c0_87 = arith.constant 0 : index
    %81 = vector.load %arg1[%c1_84, %c3_85, %c0_86, %c0_87] : memref<2x8x2x8xf32, #tpu.memory_space<vmem>>, vector<1x1x2x8xf32>
    %82 = vector.shape_cast %81 : vector<1x1x2x8xf32> to vector<2x8xf32>
    %83 = arith.truncf %82 : vector<2x8xf32> to vector<2x8xbf16>
    %c3_88 = arith.constant 3 : index
    %c0_89 = arith.constant 0 : index
    %c0_90 = arith.constant 0 : index
    %84 = vector.load %arg2[%c3_88, %c0_89, %c0_90] : memref<8x8x32xbf16, #tpu.memory_space<vmem>>, vector<1x8x32xbf16>
    %85 = vector.shape_cast %84 : vector<1x8x32xbf16> to vector<8x32xbf16>
    %cst_91 = arith.constant dense<0.000000e+00> : vector<2x32xf32>
    %86 = tpu.matmul %83, %85, %cst_91 {dimension_numbers = #tpu.dot_dimension_numbers<[1], [0], [0], [1], [0, 0, 1, 1], [], []>} : vector<2x8xbf16>, vector<8x32xbf16>, vector<2x32xf32> -> vector<2x32xf32>
    %87 = arith.addf %80, %86 : vector<2x32xf32>
    %c1_92 = arith.constant 1 : index
    %c4_93 = arith.constant 4 : index
    %c0_94 = arith.constant 0 : index
    %c0_95 = arith.constant 0 : index
    %88 = vector.load %arg1[%c1_92, %c4_93, %c0_94, %c0_95] : memref<2x8x2x8xf32, #tpu.memory_space<vmem>>, vector<1x1x2x8xf32>
    %89 = vector.shape_cast %88 : vector<1x1x2x8xf32> to vector<2x8xf32>
    %90 = arith.truncf %89 : vector<2x8xf32> to vector<2x8xbf16>
    %c4_96 = arith.constant 4 : index
    %c0_97 = arith.constant 0 : index
    %c0_98 = arith.constant 0 : index
    %91 = vector.load %arg2[%c4_96, %c0_97, %c0_98] : memref<8x8x32xbf16, #tpu.memory_space<vmem>>, vector<1x8x32xbf16>
    %92 = vector.shape_cast %91 : vector<1x8x32xbf16> to vector<8x32xbf16>
    %cst_99 = arith.constant dense<0.000000e+00> : vector<2x32xf32>
    %93 = tpu.matmul %90, %92, %cst_99 {dimension_numbers = #tpu.dot_dimension_numbers<[1], [0], [0], [1], [0, 0, 1, 1], [], []>} : vector<2x8xbf16>, vector<8x32xbf16>, vector<2x32xf32> -> vector<2x32xf32>
    %94 = arith.addf %87, %93 : vector<2x32xf32>
    %c1_100 = arith.constant 1 : index
    %c5_101 = arith.constant 5 : index
    %c0_102 = arith.constant 0 : index
    %c0_103 = arith.constant 0 : index
    %95 = vector.load %arg1[%c1_100, %c5_101, %c0_102, %c0_103] : memref<2x8x2x8xf32, #tpu.memory_space<vmem>>, vector<1x1x2x8xf32>
    %96 = vector.shape_cast %95 : vector<1x1x2x8xf32> to vector<2x8xf32>
    %97 = arith.truncf %96 : vector<2x8xf32> to vector<2x8xbf16>
    %c5_104 = arith.constant 5 : index
    %c0_105 = arith.constant 0 : index
    %c0_106 = arith.constant 0 : index
    %98 = vector.load %arg2[%c5_104, %c0_105, %c0_106] : memref<8x8x32xbf16, #tpu.memory_space<vmem>>, vector<1x8x32xbf16>
    %99 = vector.shape_cast %98 : vector<1x8x32xbf16> to vector<8x32xbf16>
    %cst_107 = arith.constant dense<0.000000e+00> : vector<2x32xf32>
    %100 = tpu.matmul %97, %99, %cst_107 {dimension_numbers = #tpu.dot_dimension_numbers<[1], [0], [0], [1], [0, 0, 1, 1], [], []>} : vector<2x8xbf16>, vector<8x32xbf16>, vector<2x32xf32> -> vector<2x32xf32>
    %101 = arith.addf %94, %100 : vector<2x32xf32>
    %c1_108 = arith.constant 1 : index
    %c6_109 = arith.constant 6 : index
    %c0_110 = arith.constant 0 : index
    %c0_111 = arith.constant 0 : index
    %102 = vector.load %arg1[%c1_108, %c6_109, %c0_110, %c0_111] : memref<2x8x2x8xf32, #tpu.memory_space<vmem>>, vector<1x1x2x8xf32>
    %103 = vector.shape_cast %102 : vector<1x1x2x8xf32> to vector<2x8xf32>
    %104 = arith.truncf %103 : vector<2x8xf32> to vector<2x8xbf16>
    %c6_112 = arith.constant 6 : index
    %c0_113 = arith.constant 0 : index
    %c0_114 = arith.constant 0 : index
    %105 = vector.load %arg2[%c6_112, %c0_113, %c0_114] : memref<8x8x32xbf16, #tpu.memory_space<vmem>>, vector<1x8x32xbf16>
    %106 = vector.shape_cast %105 : vector<1x8x32xbf16> to vector<8x32xbf16>
    %cst_115 = arith.constant dense<0.000000e+00> : vector<2x32xf32>
    %107 = tpu.matmul %104, %106, %cst_115 {dimension_numbers = #tpu.dot_dimension_numbers<[1], [0], [0], [1], [0, 0, 1, 1], [], []>} : vector<2x8xbf16>, vector<8x32xbf16>, vector<2x32xf32> -> vector<2x32xf32>
    %108 = arith.addf %101, %107 : vector<2x32xf32>
    %c1_116 = arith.constant 1 : index
    %c7_117 = arith.constant 7 : index
    %c0_118 = arith.constant 0 : index
    %c0_119 = arith.constant 0 : index
    %109 = vector.load %arg1[%c1_116, %c7_117, %c0_118, %c0_119] : memref<2x8x2x8xf32, #tpu.memory_space<vmem>>, vector<1x1x2x8xf32>
    %110 = vector.shape_cast %109 : vector<1x1x2x8xf32> to vector<2x8xf32>
    %111 = arith.truncf %110 : vector<2x8xf32> to vector<2x8xbf16>
    %c7_120 = arith.constant 7 : index
    %c0_121 = arith.constant 0 : index
    %c0_122 = arith.constant 0 : index
    %112 = vector.load %arg2[%c7_120, %c0_121, %c0_122] : memref<8x8x32xbf16, #tpu.memory_space<vmem>>, vector<1x8x32xbf16>
    %113 = vector.shape_cast %112 : vector<1x8x32xbf16> to vector<8x32xbf16>
    %cst_123 = arith.constant dense<0.000000e+00> : vector<2x32xf32>
    %114 = tpu.matmul %111, %113, %cst_123 {dimension_numbers = #tpu.dot_dimension_numbers<[1], [0], [0], [1], [0, 0, 1, 1], [], []>} : vector<2x8xbf16>, vector<8x32xbf16>, vector<2x32xf32> -> vector<2x32xf32>
    %115 = arith.addf %108, %114 : vector<2x32xf32>
    %116 = vector.broadcast %0 : vector<1x32xf32> to vector<2x32xf32>
    %117 = arith.addf %115, %116 : vector<2x32xf32>
    %c1_124 = arith.constant 1 : index
    %c0_125 = arith.constant 0 : index
    %c0_126 = arith.constant 0 : index
    %118 = vector.load %arg4[%c1_124, %c0_125, %c0_126] : memref<2x2x32xf32, #tpu.memory_space<vmem>>, vector<1x2x32xf32>
    %119 = vector.shape_cast %118 : vector<1x2x32xf32> to vector<2x32xf32>
    %120 = vector.shape_cast %117 : vector<2x32xf32> to vector<1x2x32xf32>
    tpu.vector_store %arg4[%c1_124, %c0_125, %c0_126], %120 {strides = array<i32>} : memref<2x2x32xf32, #tpu.memory_space<vmem>>, vector<1x2x32xf32>,
    return
  }
  func.func @transform_0(%arg0: i32) -> (i32, i32, i32, i32) {
    %c0_i32 = arith.constant 0 : i32
    %c0_i32_0 = arith.constant 0 : i32
    %c0_i32_1 = arith.constant 0 : i32
    %c0_i32_2 = arith.constant 0 : i32
    return %arg0, %c0_i32, %c0_i32_0, %c0_i32_1 : i32, i32, i32, i32
  }
  func.func @transform_1(%arg0: i32) -> (i32, i32, i32) {
    %c0_i32 = arith.constant 0 : i32
    %c0_i32_0 = arith.constant 0 : i32
    %c0_i32_1 = arith.constant 0 : i32
    %c0_i32_2 = arith.constant 0 : i32
    return %c0_i32, %c0_i32_0, %c0_i32_1 : i32, i32, i32
  }
  func.func @transform_2(%arg0: i32) -> (i32, i32) {
    %c0_i32 = arith.constant 0 : i32
    %c0_i32_0 = arith.constant 0 : i32
    %c0_i32_1 = arith.constant 0 : i32
    return %c0_i32, %c0_i32_0 : i32, i32
  }
  func.func @transform_3(%arg0: i32) -> (i32, i32, i32) {
    %c0_i32 = arith.constant 0 : i32
    %c0_i32_0 = arith.constant 0 : i32
    %c0_i32_1 = arith.constant 0 : i32
    return %arg0, %c0_i32, %c0_i32_0 : i32, i32, i32
  }
}

</mosaic_0001>

<llo_original>
// kernel: tpu_custom_call.1
$region0: #{tpu_custom_call.1}
  #allocation0 [shape = 'u32[]', space=smem, size = 0x4, offset = 0x4, fixed_abs, tag = 'smem constant byte address 0x4 - core index']
  #allocation1 [shape = 'u32[144,128]{1,0:T(1,128)}', space=vmem, size = 0x12000, scoped, tag = 'internal scratch']
  %s0 = inlined_call_operand.hbm [shape: f32[4,8,2,8], index: 0, kind: input, shape index: {}]
  %s1 = inlined_call_operand.hbm [shape: bf16[8,8,32], index: 1, kind: input, shape index: {}]
  %s2 = inlined_call_operand.vmem [shape: f32[1,32], index: 2, kind: input, shape index: {}]
  %s3 = inlined_call_operand.hbm [shape: f32[4,2,32], index: 3, kind: output, shape index: {}]
  %s4 = sld [smem:[#allocation0]]
  $region53: #{tpu_custom_call.1} parent=0
    _
  %s6 = ssub.s32 1, %s4
  %s7 = scalar_select 0, %s6, %s4
  $region1: #{tpu_custom_call.1} parent=0
    #allocation2 [shape = 'u8[32768]{0}', space=vmem, size = 0x8000, scoped, tag = 'input window, operand 0']
    #allocation3 [shape = 's32[2]{0}', space=sflag, size = 0x8, scoped, tag = 'scoped memory for tpu_custom_call.1']
    #allocation4 [shape = 's32[2]{0}', space=sflag, size = 0x8, scoped, tag = 'scoped memory for tpu_custom_call.1']
    #allocation5 [shape = 'u8[16384]{0}', space=vmem, size = 0x4000, scoped, tag = 'input window, operand 1, single buffered']
    #allocation6 [shape = 's32[1]{0}', space=sflag, size = 0x4, scoped, tag = 'scoped memory for tpu_custom_call.1']
    #allocation7 [shape = 'u8[4096]{0}', space=vmem, size = 0x1000, scoped, tag = 'output window, operand 0']
    %8 = vsyncpa [#allocation3], 0
    %s9 = scalar_lea.sflag [#allocation3], 1
    %10 = vsyncpa %s9, 0
    %11 = vsyncpa [#allocation6], 0
    %12 = vsyncpa [#allocation4], 0
    %s13 = scalar_lea.sflag [#allocation4], 1
    %14 = vsyncpa %s13, 0
    loop: start=0, step=1, limit=4
    $region2: #{tpu_custom_call.1} parent=1 // loop_pre_header
      _
    $region3: #{tpu_custom_call.1} parent=1 // loop_header
      %s16 = sphi 0, %s20
      %p17 = scmp.ge.s32.totalorder %s16, 4
      %s26 = sphi 0, %s28
      %s29 = sphi 0, %s26
      %s30 = sphi 0, %s29
      %s46 = sphi 0, %s30
      %s50 = sphi 0, %s50
      %s52 = sphi 0, %s50
      %s53 = sphi 0, %s52
      %s67 = sphi 0, %s53
      %s71 = sphi 0, %s71
      %s73 = sphi 0, %s71
      %s74 = sphi 0, %s73
      %s88 = sphi 0, %s74
      %s94 = sphi 0, %s96
      %s97 = sphi 0, %s94
      %s98 = sphi 0, %s97
      %s114 = sphi 0, %s98
    $region4: #{tpu_custom_call.1} parent=1 // loop_header_branch
      %19 = sbr.rel (%p17) target = $region8
    $region5: #{tpu_custom_call.1} parent=1 // loop_body
      %s21 = ssub.s32 %s16, 1
      %s22 = ssub.s32 %s16, 2
      %s23 = sadd.s32 %s16, 1
      %s24 = ssub.s32 %s16, %s23
      %p25 = scmp.eq.s32.totalorder %s24, 0
      %s27 = sadd.s32 %s26, 1
      %s28 = scalar_select %p25, %s26, %s27
      %p31 = pneg %p25
      %p32 = scmp.eq.s32.totalorder %s16, 1
      %p33 = por %p31, %p32
      %p34 = scmp.ne.s32.totalorder %s26, %s29
      %p35 = scmp.eq.s32.totalorder %s16, 0
      %p36 = por %p34, %p35
      %p37 = scmp.ne.s32.totalorder %s26, %s29
      %p38 = scmp.eq.s32.totalorder %s21, 1
      %p39 = por %p37, %p38
      %p40 = scmp.ne.s32.totalorder %s29, %s30
      %p41 = scmp.eq.s32.totalorder %s21, 0
      %p42 = por %p40, %p41
      %p43 = scmp.ne.s32.totalorder %s29, %s30
      %p44 = scmp.eq.s32.totalorder %s22, 1
      %p45 = por %p43, %p44
      %p47 = scmp.ne.s32.totalorder %s30, %s46
      %p48 = scmp.eq.s32.totalorder %s22, 0
      %p49 = por %p47, %p48
      %s51 = sadd.s32 %s50, 1
      %p54 = scmp.eq.s32.totalorder %s16, 1
      %p55 = scmp.ne.s32.totalorder %s50, %s52
      %p56 = scmp.eq.s32.totalorder %s16, 0
      %p57 = por %p55, %p56
      %p58 = scmp.ne.s32.totalorder %s50, %s52
      %p59 = scmp.eq.s32.totalorder %s21, 1
      %p60 = por %p58, %p59
      %p61 = scmp.ne.s32.totalorder %s52, %s53
      %p62 = scmp.eq.s32.totalorder %s21, 0
      %p63 = por %p61, %p62
      %p64 = scmp.ne.s32.totalorder %s52, %s53
      %p65 = scmp.eq.s32.totalorder %s22, 1
      %p66 = por %p64, %p65
      %p68 = scmp.ne.s32.totalorder %s53, %s67
      %p69 = scmp.eq.s32.totalorder %s22, 0
      %p70 = por %p68, %p69
      %s72 = sadd.s32 %s71, 1
      %p75 = scmp.eq.s32.totalorder %s16, 1
      %p76 = scmp.ne.s32.totalorder %s71, %s73
      %p77 = scmp.eq.s32.totalorder %s16, 0
      %p78 = por %p76, %p77
      %p79 = scmp.ne.s32.totalorder %s71, %s73
      %p80 = scmp.eq.s32.totalorder %s21, 1
      %p81 = por %p79, %p80
      %p82 = scmp.ne.s32.totalorder %s73, %s74
      %p83 = scmp.eq.s32.totalorder %s21, 0
      %p84 = por %p82, %p83
      %p85 = scmp.ne.s32.totalorder %s73, %s74
      %p86 = scmp.eq.s32.totalorder %s22, 1
      %p87 = por %p85, %p86
      %p89 = scmp.ne.s32.totalorder %s74, %s88
      %p90 = scmp.eq.s32.totalorder %s22, 0
      %p91 = por %p89, %p90
      %s92 = ssub.s32 %s16, %s23
      %p93 = scmp.eq.s32.totalorder %s92, 0
      %s95 = sadd.s32 %s94, 1
      %s96 = scalar_select %p93, %s94, %s95
      %p99 = pneg %p93
      %p100 = scmp.eq.s32.totalorder %s16, 1
      %p101 = por %p99, %p100
      %p102 = scmp.ne.s32.totalorder %s94, %s97
      %p103 = scmp.eq.s32.totalorder %s16, 0
      %p104 = por %p102, %p103
      %p105 = scmp.ne.s32.totalorder %s94, %s97
      %p106 = scmp.eq.s32.totalorder %s21, 1
      %p107 = por %p105, %p106
      %p108 = scmp.ne.s32.totalorder %s97, %s98
      %p109 = scmp.eq.s32.totalorder %s21, 0
      %p110 = por %p108, %p109
      %p111 = scmp.ne.s32.totalorder %s97, %s98
      %p112 = scmp.eq.s32.totalorder %s22, 1
      %p113 = por %p111, %p112
      %p115 = scmp.ne.s32.totalorder %s98, %s114
      %p116 = scmp.eq.s32.totalorder %s22, 0
      %p117 = por %p115, %p116
      %p118 = scmp.le.s32.totalorder 1, %s16
      %p119 = scmp.lt.s32.totalorder %s16, 3
      %p120 = pnand %p118, %p119
      %p121 = pneg %p120
      // Predicated region
      $region9: #{tpu_custom_call.1} parent=5 // pred_check
        _
      $region10: #{tpu_custom_call.1} parent=5 // pred_check_branch
        %123 = sbr.rel (%p120) target = $region12
      $region11: #{tpu_custom_call.1} parent=5 // pred_region
        %s124 = ssub.s32 %s16, 1
        // Predicated region
        $region13: #{tpu_custom_call.1} parent=11 // pred_check
          %p125 = pneg %p63
        $region14: #{tpu_custom_call.1} parent=11 // pred_check_branch
          %127 = sbr.rel (%p125) target = $region16
        $region15: #{tpu_custom_call.1} parent=11 // pred_region
          %s129 = ssub.s32 512, 512
          %130 = vsyncadd [#allocation6], %s129
          %s131 = sshll.u32 [#allocation5], 4
          %s132 = int_to_ptr.vmem [resolvable:$true] %s131
          %137 = dma.hbm_to_vmem [thread:$0]  %s1, 512, %s132, [#allocation6], 64, 64, 4
        $region16: #{tpu_custom_call.1} parent=11 // pred_fallthru
          _
        // Predicated region
        $region17: #{tpu_custom_call.1} parent=11 // pred_check
          %p138 = pneg %p84
        $region18: #{tpu_custom_call.1} parent=11 // pred_check_branch
          %140 = sbr.rel (%p138) target = $region20
        $region19: #{tpu_custom_call.1} parent=11 // pred_region
          _
        $region20: #{tpu_custom_call.1} parent=11 // pred_fallthru
          _
      $region12: #{tpu_custom_call.1} parent=5 // pred_fallthru
        _
      %p141 = scmp.lt.s32.totalorder %s16, 2
      // Predicated region
      $region21: #{tpu_custom_call.1} parent=5 // pred_check
        %p142 = pneg %p141
      $region22: #{tpu_custom_call.1} parent=5 // pred_check_branch
        %144 = sbr.rel (%p142) target = $region24
      $region23: #{tpu_custom_call.1} parent=5 // pred_region
        // Predicated region
        $region25: #{tpu_custom_call.1} parent=23 // pred_check
          %p145 = pneg %p36
        $region26: #{tpu_custom_call.1} parent=23 // pred_check_branch
          %147 = sbr.rel (%p145) target = $region28
        $region27: #{tpu_custom_call.1} parent=23 // pred_region
          %s148 = sand.u32 %s26, 1
          %s149 = scalar_lea.sflag [#allocation3], %s148
          %s150 = sand.u32 %s26, 1
          %s151 = smul.addr %s150, 32
          %s152 = scalar_lea.vmem [#allocation2], %s151
          %s153 = smul.u32 2, %s16
          %s155 = ssub.s32 512, 512
          %156 = vsyncadd %s149, %s155
          %s157 = smul.addr %s153, 8
          %s158 = smul.addr %s157, 32
          %s159 = scalar_lea.hbm %s0, %s158
          %s160 = sshll.u32 %s152, 4
          %s161 = int_to_ptr.vmem [resolvable:$true] %s160
          %166 = dma.hbm_to_vmem [thread:$0]  %s159, 512, %s161, %s149, 32, 32, 2
        $region28: #{tpu_custom_call.1} parent=23 // pred_fallthru
          _
      $region24: #{tpu_custom_call.1} parent=5 // pred_fallthru
        _
      %p167 = scmp.le.s32.totalorder 1, %s16
      %p168 = scmp.lt.s32.totalorder %s16, 3
      %p169 = pnand %p167, %p168
      %p170 = pneg %p169
      // Predicated region
      $region29: #{tpu_custom_call.1} parent=5 // pred_check
        _
      $region30: #{tpu_custom_call.1} parent=5 // pred_check_branch
        %172 = sbr.rel (%p169) target = $region32
      $region31: #{tpu_custom_call.1} parent=5 // pred_region
        %s173 = ssub.s32 %s16, 1
        %s174 = sand.u32 %s29, 1
        %s175 = scalar_lea.sflag [#allocation3], %s174
        %s176 = sand.u32 %s29, 1
        %s177 = smul.addr %s176, 32
        %s178 = scalar_lea.vmem [#allocation2], %s177
        // Predicated region
        $region33: #{tpu_custom_call.1} parent=31 // pred_check
          %p179 = pneg %p42
        $region34: #{tpu_custom_call.1} parent=31 // pred_check_branch
          %181 = sbr.rel (%p179) target = $region36
        $region35: #{tpu_custom_call.1} parent=31 // pred_region
          %182 = dma.done %s175, 512
        $region36: #{tpu_custom_call.1} parent=31 // pred_fallthru
          _
        // Predicated region
        $region37: #{tpu_custom_call.1} parent=31 // pred_check
          %p183 = pneg %p63
        $region38: #{tpu_custom_call.1} parent=31 // pred_check_branch
          %185 = sbr.rel (%p183) target = $region40
        $region39: #{tpu_custom_call.1} parent=31 // pred_region
          %186 = dma.done [#allocation6], 512
        $region40: #{tpu_custom_call.1} parent=31 // pred_fallthru
          _
        %s187 = sand.u32 %s29, 1
        %s188 = scalar_lea.sflag [#allocation3], %s187
        %s189 = sand.u32 %s29, 1
        %s190 = smul.addr %s189, 32
        %s191 = scalar_lea.vmem [#allocation2], %s190
        %p192 = pneg %p42
        %p193 = pneg %p39
        %p194 = pneg %p63
        %p195 = pneg %p60
        %p196 = pneg %p84
        %p197 = pneg %p81
        %p198 = pneg %p110
        %p199 = pneg %p107
        %s200 = sand.u32 %s97, 1
        %s201 = scalar_lea.sflag [#allocation4], %s200
        %s202 = sand.u32 %s97, 1
        %s203 = smul.addr %s202, 4
        %s204 = scalar_lea.vmem [#allocation7], %s203
        %s205 = smul.u32 2, %s21
        %s206 = smul.u32 2, %s21
        %v208 = vld [vmem:[%s2] sm:$0x1]
        %v209 = vld [vmem:[%s178] sm:$0x3]
        %v210 = vpack.c.bf16 %v209, %v209
        %v211 = vld [vmem:[#allocation5] sm:$0xf]
        %s212 = scalar_lea.vmem %s178, 2 [#allocation2]
        %v213 = vld [vmem:[%s212] sm:$0x3]
        %v214 = vpack.c.bf16 %v213, %v213
        %s215 = scalar_lea.vmem [#allocation5], 4
        %v216 = vld [vmem:[%s215] sm:$0xf]
        %vm217 = vcmask 64512
        %v219 = vsel %vm217, %v214, 0
        %vm221 = vcmask 1043456
        %v223 = vsel %vm221, %v216, 0
        %225 = vmatprep.subr.bf16.mxu0 0
        %226 = vmatpush1.bf16.msra.mxu0 0
        %227 = vmatprep.subr.bf16.mxu0 0
        %228 = vmatpush1.bf16.msra.mxu0 0
        %229 = vmatprep.subr.bf16.mxu0 0
        %230 = vmatpush1.bf16.msra.mxu0 0
        %231 = vmatprep.subr.bf16.mxu0 0
        %232 = vmatpush1.bf16.msra.mxu0 0
        %233 = vmatprep.subr.bf16.mxu0 0
        %234 = vmatpush1.bf16.msra.mxu0 0
        %235 = vmatprep.subr.bf16.mxu0 0
        %236 = vmatpush1.bf16.msra.mxu0 0
        %237 = vmatprep.subr.bf16.mxu0 0
        %238 = vmatpush1.bf16.msra.mxu0 0
        %239 = vmatprep.subr.bf16.mxu0 0
        %240 = vmatpush1.bf16.msra.mxu0 %v223
        %241 = vmatprep.subr.bf16.mxu0 0
        %242 = vmatpush2.bf16.msra.mxu0 0
        %243 = vmatprep.subr.bf16.mxu0 0
        %244 = vmatpush2.bf16.msra.mxu0 0
        %245 = vmatprep.subr.bf16.mxu0 0
        %246 = vmatpush2.bf16.msra.mxu0 0
        %247 = vmatprep.subr.bf16.mxu0 0
        %248 = vmatpush2.bf16.msra.mxu0 0
        %249 = vmatprep.subr.bf16.mxu0 0
        %250 = vmatpush2.bf16.msra.mxu0 0
        %251 = vmatprep.subr.bf16.mxu0 0
        %252 = vmatpush2.bf16.msra.mxu0 0
        %253 = vmatprep.subr.bf16.mxu0 0
        %254 = vmatpush2.bf16.msra.mxu0 0
        %255 = vmatprep.subr.bf16.mxu0 0
        %256 = vmatpush2.bf16.msra.mxu0 0
        %257 = vmatprep.mubr.bf16.mxu0 0
        %258 = vmatmul.mubr.bf16.gmra.mxu0 %v219
        %v259 = vpop.f32.mrf.mxu0
        %v260 = vadd.f32 0.0, %v259
        %v261 = vpop.f32.mrf.mxu0
        %v262 = vpop.f32.mrf.mxu0
        %v263 = vpop.f32.mrf.mxu0
        %264 = vdwg.mxu0
        %v266 = vsel %vm217, %v210, 0
        %v269 = vsel %vm221, %v211, 0
        %271 = vmatprep.subr.bf16.mxu0 0
        %272 = vmatpush1.bf16.msra.mxu0 0
        %273 = vmatprep.subr.bf16.mxu0 0
        %274 = vmatpush1.bf16.msra.mxu0 0
        %275 = vmatprep.subr.bf16.mxu0 0
        %276 = vmatpush1.bf16.msra.mxu0 0
        %277 = vmatprep.subr.bf16.mxu0 0
        %278 = vmatpush1.bf16.msra.mxu0 0
        %279 = vmatprep.subr.bf16.mxu0 0
        %280 = vmatpush1.bf16.msra.mxu0 0
        %281 = vmatprep.subr.bf16.mxu0 0
        %282 = vmatpush1.bf16.msra.mxu0 0
        %283 = vmatprep.subr.bf16.mxu0 0
        %284 = vmatpush1.bf16.msra.mxu0 0
        %285 = vmatprep.subr.bf16.mxu0 0
        %286 = vmatpush1.bf16.msra.mxu0 %v269
        %287 = vmatprep.subr.bf16.mxu0 0
        %288 = vmatpush2.bf16.msra.mxu0 0
        %289 = vmatprep.subr.bf16.mxu0 0
        %290 = vmatpush2.bf16.msra.mxu0 0
        %291 = vmatprep.subr.bf16.mxu0 0
        %292 = vmatpush2.bf16.msra.mxu0 0
        %293 = vmatprep.subr.bf16.mxu0 0
        %294 = vmatpush2.bf16.msra.mxu0 0
        %295 = vmatprep.subr.bf16.mxu0 0
        %296 = vmatpush2.bf16.msra.mxu0 0
        %297 = vmatprep.subr.bf16.mxu0 0
        %298 = vmatpush2.bf16.msra.mxu0 0
        %299 = vmatprep.subr.bf16.mxu0 0
        %300 = vmatpush2.bf16.msra.mxu0 0
        %301 = vmatprep.subr.bf16.mxu0 0
        %302 = vmatpush2.bf16.msra.mxu0 0
        %303 = vmatprep.mubr.bf16.mxu0 0
        %304 = vmatmul.mubr.bf16.gmra.mxu0 %v266
        %v305 = vpop.f32.mrf.mxu0
        %v306 = vadd.f32 %v260, %v305
        %v307 = vpop.f32.mrf.mxu0
        %v308 = vpop.f32.mrf.mxu0
        %v309 = vpop.f32.mrf.mxu0
        %310 = vdwg.mxu0
        %s311 = scalar_lea.vmem %s178, 4 [#allocation2]
        %v312 = vld [vmem:[%s311] sm:$0x3]
        %v313 = vpack.c.bf16 %v312, %v312
        %s314 = scalar_lea.vmem [#allocation5], 8
        %v315 = vld [vmem:[%s314] sm:$0xf]
        %v317 = vsel %vm217, %v313, 0
        %v320 = vsel %vm221, %v315, 0
        %322 = vmatprep.subr.bf16.mxu0 0
        %323 = vmatpush1.bf16.msra.mxu0 0
        %324 = vmatprep.subr.bf16.mxu0 0
        %325 = vmatpush1.bf16.msra.mxu0 0
        %326 = vmatprep.subr.bf16.mxu0 0
        %327 = vmatpush1.bf16.msra.mxu0 0
        %328 = vmatprep.subr.bf16.mxu0 0
        %329 = vmatpush1.bf16.msra.mxu0 0
        %330 = vmatprep.subr.bf16.mxu0 0
        %331 = vmatpush1.bf16.msra.mxu0 0
        %332 = vmatprep.subr.bf16.mxu0 0
        %333 = vmatpush1.bf16.msra.mxu0 0
        %334 = vmatprep.subr.bf16.mxu0 0
        %335 = vmatpush1.bf16.msra.mxu0 0
        %336 = vmatprep.subr.bf16.mxu0 0
        %337 = vmatpush1.bf16.msra.mxu0 %v320
        %338 = vmatprep.subr.bf16.mxu0 0
        %339 = vmatpush2.bf16.msra.mxu0 0
        %340 = vmatprep.subr.bf16.mxu0 0
        %341 = vmatpush2.bf16.msra.mxu0 0
        %342 = vmatprep.subr.bf16.mxu0 0
        %343 = vmatpush2.bf16.msra.mxu0 0
        %344 = vmatprep.subr.bf16.mxu0 0
        %345 = vmatpush2.bf16.msra.mxu0 0
        %346 = vmatprep.subr.bf16.mxu0 0
        %347 = vmatpush2.bf16.msra.mxu0 0
        %348 = vmatprep.subr.bf16.mxu0 0
        %349 = vmatpush2.bf16.msra.mxu0 0
        %350 = vmatprep.subr.bf16.mxu0 0
        %351 = vmatpush2.bf16.msra.mxu0 0
        %352 = vmatprep.subr.bf16.mxu0 0
        %353 = vmatpush2.bf16.msra.mxu0 0
        %354 = vmatprep.mubr.bf16.mxu0 0
        %355 = vmatmul.mubr.bf16.gmra.mxu0 %v317
        %v356 = vpop.f32.mrf.mxu0
        %v357 = vadd.f32 0.0, %v356
        %v358 = vpop.f32.mrf.mxu0
        %v359 = vpop.f32.mrf.mxu0
        %v360 = vpop.f32.mrf.mxu0
        %361 = vdwg.mxu0
        %v362 = vadd.f32 %v306, %v357
        %s363 = scalar_lea.vmem %s178, 6 [#allocation2]
        %v364 = vld [vmem:[%s363] sm:$0x3]
        %v365 = vpack.c.bf16 %v364, %v364
        %s366 = scalar_lea.vmem [#allocation5], 12
        %v367 = vld [vmem:[%s366] sm:$0xf]
        %v369 = vsel %vm217, %v365, 0
        %v372 = vsel %vm221, %v367, 0
        %374 = vmatprep.subr.bf16.mxu0 0
        %375 = vmatpush1.bf16.msra.mxu0 0
        %376 = vmatprep.subr.bf16.mxu0 0
        %377 = vmatpush1.bf16.msra.mxu0 0
        %378 = vmatprep.subr.bf16.mxu0 0
        %379 = vmatpush1.bf16.msra.mxu0 0
        %380 = vmatprep.subr.bf16.mxu0 0
        %381 = vmatpush1.bf16.msra.mxu0 0
        %382 = vmatprep.subr.bf16.mxu0 0
        %383 = vmatpush1.bf16.msra.mxu0 0
        %384 = vmatprep.subr.bf16.mxu0 0
        %385 = vmatpush1.bf16.msra.mxu0 0
        %386 = vmatprep.subr.bf16.mxu0 0
        %387 = vmatpush1.bf16.msra.mxu0 0
        %388 = vmatprep.subr.bf16.mxu0 0
        %389 = vmatpush1.bf16.msra.mxu0 %v372
        %390 = vmatprep.subr.bf16.mxu0 0
        %391 = vmatpush2.bf16.msra.mxu0 0
        %392 = vmatprep.subr.bf16.mxu0 0
        %393 = vmatpush2.bf16.msra.mxu0 0
        %394 = vmatprep.subr.bf16.mxu0 0
        %395 = vmatpush2.bf16.msra.mxu0 0
        %396 = vmatprep.subr.bf16.mxu0 0
        %397 = vmatpush2.bf16.msra.mxu0 0
        %398 = vmatprep.subr.bf16.mxu0 0
        %399 = vmatpush2.bf16.msra.mxu0 0
        %400 = vmatprep.subr.bf16.mxu0 0
        %401 = vmatpush2.bf16.msra.mxu0 0
        %402 = vmatprep.subr.bf16.mxu0 0
        %403 = vmatpush2.bf16.msra.mxu0 0
        %404 = vmatprep.subr.bf16.mxu0 0
        %405 = vmatpush2.bf16.msra.mxu0 0
        %406 = vmatprep.mubr.bf16.mxu0 0
        %407 = vmatmul.mubr.bf16.gmra.mxu0 %v369
        %v408 = vpop.f32.mrf.mxu0
        %v409 = vadd.f32 0.0, %v408
        %v410 = vpop.f32.mrf.mxu0
        %v411 = vpop.f32.mrf.mxu0
        %v412 = vpop.f32.mrf.mxu0
        %413 = vdwg.mxu0
        %v414 = vadd.f32 %v362, %v409
        %s415 = scalar_lea.vmem %s178, 8 [#allocation2]
        %v416 = vld [vmem:[%s415] sm:$0x3]
        %v417 = vpack.c.bf16 %v416, %v416
        %s418 = scalar_lea.vmem [#allocation5], 16
        %v419 = vld [vmem:[%s418] sm:$0xf]
        %v421 = vsel %vm217, %v417, 0
        %v424 = vsel %vm221, %v419, 0
        %426 = vmatprep.subr.bf16.mxu0 0
        %427 = vmatpush1.bf16.msra.mxu0 0
        %428 = vmatprep.subr.bf16.mxu0 0
        %429 = vmatpush1.bf16.msra.mxu0 0
        %430 = vmatprep.subr.bf16.mxu0 0
        %431 = vmatpush1.bf16.msra.mxu0 0
        %432 = vmatprep.subr.bf16.mxu0 0
        %433 = vmatpush1.bf16.msra.mxu0 0
        %434 = vmatprep.subr.bf16.mxu0 0
        %435 = vmatpush1.bf16.msra.mxu0 0
        %436 = vmatprep.subr.bf16.mxu0 0
        %437 = vmatpush1.bf16.msra.mxu0 0
        %438 = vmatprep.subr.bf16.mxu0 0
        %439 = vmatpush1.bf16.msra.mxu0 0
        %440 = vmatprep.subr.bf16.mxu0 0
        %441 = vmatpush1.bf16.msra.mxu0 %v424
        %442 = vmatprep.subr.bf16.mxu0 0
        %443 = vmatpush2.bf16.msra.mxu0 0
        %444 = vmatprep.subr.bf16.mxu0 0
        %445 = vmatpush2.bf16.msra.mxu0 0
        %446 = vmatprep.subr.bf16.mxu0 0
        %447 = vmatpush2.bf16.msra.mxu0 0
        %448 = vmatprep.subr.bf16.mxu0 0
        %449 = vmatpush2.bf16.msra.mxu0 0
        %450 = vmatprep.subr.bf16.mxu0 0
        %451 = vmatpush2.bf16.msra.mxu0 0
        %452 = vmatprep.subr.bf16.mxu0 0
        %453 = vmatpush2.bf16.msra.mxu0 0
        %454 = vmatprep.subr.bf16.mxu0 0
        %455 = vmatpush2.bf16.msra.mxu0 0
        %456 = vmatprep.subr.bf16.mxu0 0
        %457 = vmatpush2.bf16.msra.mxu0 0
        %458 = vmatprep.mubr.bf16.mxu0 0
        %459 = vmatmul.mubr.bf16.gmra.mxu0 %v421
        %v460 = vpop.f32.mrf.mxu0
        %v461 = vadd.f32 0.0, %v460
        %v462 = vpop.f32.mrf.mxu0
        %v463 = vpop.f32.mrf.mxu0
        %v464 = vpop.f32.mrf.mxu0
        %465 = vdwg.mxu0
        %v466 = vadd.f32 %v414, %v461
        %s467 = scalar_lea.vmem %s178, 10 [#allocation2]
        %v468 = vld [vmem:[%s467] sm:$0x3]
        %v469 = vpack.c.bf16 %v468, %v468
        %s470 = scalar_lea.vmem [#allocation5], 20
        %v471 = vld [vmem:[%s470] sm:$0xf]
        %v473 = vsel %vm217, %v469, 0
        %v476 = vsel %vm221, %v471, 0
        %478 = vmatprep.subr.bf16.mxu0 0
        %479 = vmatpush1.bf16.msra.mxu0 0
        %480 = vmatprep.subr.bf16.mxu0 0
        %481 = vmatpush1.bf16.msra.mxu0 0
        %482 = vmatprep.subr.bf16.mxu0 0
        %483 = vmatpush1.bf16.msra.mxu0 0
        %484 = vmatprep.subr.bf16.mxu0 0
        %485 = vmatpush1.bf16.msra.mxu0 0
        %486 = vmatprep.subr.bf16.mxu0 0
        %487 = vmatpush1.bf16.msra.mxu0 0
        %488 = vmatprep.subr.bf16.mxu0 0
        %489 = vmatpush1.bf16.msra.mxu0 0
        %490 = vmatprep.subr.bf16.mxu0 0
        %491 = vmatpush1.bf16.msra.mxu0 0
        %492 = vmatprep.subr.bf16.mxu0 0
        %493 = vmatpush1.bf16.msra.mxu0 %v476
        %494 = vmatprep.subr.bf16.mxu0 0
        %495 = vmatpush2.bf16.msra.mxu0 0
        %496 = vmatprep.subr.bf16.mxu0 0
        %497 = vmatpush2.bf16.msra.mxu0 0
        %498 = vmatprep.subr.bf16.mxu0 0
        %499 = vmatpush2.bf16.msra.mxu0 0
        %500 = vmatprep.subr.bf16.mxu0 0
        %501 = vmatpush2.bf16.msra.mxu0 0
        %502 = vmatprep.subr.bf16.mxu0 0
        %503 = vmatpush2.bf16.msra.mxu0 0
        %504 = vmatprep.subr.bf16.mxu0 0
        %505 = vmatpush2.bf16.msra.mxu0 0
        %506 = vmatprep.subr.bf16.mxu0 0
        %507 = vmatpush2.bf16.msra.mxu0 0
        %508 = vmatprep.subr.bf16.mxu0 0
        %509 = vmatpush2.bf16.msra.mxu0 0
        %510 = vmatprep.mubr.bf16.mxu0 0
        %511 = vmatmul.mubr.bf16.gmra.mxu0 %v473
        %v512 = vpop.f32.mrf.mxu0
        %v513 = vadd.f32 0.0, %v512
        %v514 = vpop.f32.mrf.mxu0
        %v515 = vpop.f32.mrf.mxu0
        %v516 = vpop.f32.mrf.mxu0
        %517 = vdwg.mxu0
        %v518 = vadd.f32 %v466, %v513
        %s519 = scalar_lea.vmem %s178, 12 [#allocation2]
        %v520 = vld [vmem:[%s519] sm:$0x3]
        %v521 = vpack.c.bf16 %v520, %v520
        %s522 = scalar_lea.vmem [#allocation5], 24
        %v523 = vld [vmem:[%s522] sm:$0xf]
        %v525 = vsel %vm217, %v521, 0
        %v528 = vsel %vm221, %v523, 0
        %530 = vmatprep.subr.bf16.mxu0 0
        %531 = vmatpush1.bf16.msra.mxu0 0
        %532 = vmatprep.subr.bf16.mxu0 0
        %533 = vmatpush1.bf16.msra.mxu0 0
        %534 = vmatprep.subr.bf16.mxu0 0
        %535 = vmatpush1.bf16.msra.mxu0 0
        %536 = vmatprep.subr.bf16.mxu0 0
        %537 = vmatpush1.bf16.msra.mxu0 0
        %538 = vmatprep.subr.bf16.mxu0 0
        %539 = vmatpush1.bf16.msra.mxu0 0
        %540 = vmatprep.subr.bf16.mxu0 0
        %541 = vmatpush1.bf16.msra.mxu0 0
        %542 = vmatprep.subr.bf16.mxu0 0
        %543 = vmatpush1.bf16.msra.mxu0 0
        %544 = vmatprep.subr.bf16.mxu0 0
        %545 = vmatpush1.bf16.msra.mxu0 %v528
        %546 = vmatprep.subr.bf16.mxu0 0
        %547 = vmatpush2.bf16.msra.mxu0 0
        %548 = vmatprep.subr.bf16.mxu0 0
        %549 = vmatpush2.bf16.msra.mxu0 0
        %550 = vmatprep.subr.bf16.mxu0 0
        %551 = vmatpush2.bf16.msra.mxu0 0
        %552 = vmatprep.subr.bf16.mxu0 0
        %553 = vmatpush2.bf16.msra.mxu0 0
        %554 = vmatprep.subr.bf16.mxu0 0
        %555 = vmatpush2.bf16.msra.mxu0 0
        %556 = vmatprep.subr.bf16.mxu0 0
        %557 = vmatpush2.bf16.msra.mxu0 0
        %558 = vmatprep.subr.bf16.mxu0 0
        %559 = vmatpush2.bf16.msra.mxu0 0
        %560 = vmatprep.subr.bf16.mxu0 0
        %561 = vmatpush2.bf16.msra.mxu0 0
        %562 = vmatprep.mubr.bf16.mxu0 0
        %563 = vmatmul.mubr.bf16.gmra.mxu0 %v525
        %v564 = vpop.f32.mrf.mxu0
        %v565 = vadd.f32 0.0, %v564
        %v566 = vpop.f32.mrf.mxu0
        %v567 = vpop.f32.mrf.mxu0
        %v568 = vpop.f32.mrf.mxu0
        %569 = vdwg.mxu0
        %v570 = vadd.f32 %v518, %v565
        %s571 = scalar_lea.vmem %s178, 14 [#allocation2]
        %v572 = vld [vmem:[%s571] sm:$0x3]
        %v573 = vpack.c.bf16 %v572, %v572
        %s574 = scalar_lea.vmem [#allocation5], 28
        %v575 = vld [vmem:[%s574] sm:$0xf]
        %v577 = vsel %vm217, %v573, 0
        %v580 = vsel %vm221, %v575, 0
        %582 = vmatprep.subr.bf16.mxu0 0
        %583 = vmatpush1.bf16.msra.mxu0 0
        %584 = vmatprep.subr.bf16.mxu0 0
        %585 = vmatpush1.bf16.msra.mxu0 0
        %586 = vmatprep.subr.bf16.mxu0 0
        %587 = vmatpush1.bf16.msra.mxu0 0
        %588 = vmatprep.subr.bf16.mxu0 0
        %589 = vmatpush1.bf16.msra.mxu0 0
        %590 = vmatprep.subr.bf16.mxu0 0
        %591 = vmatpush1.bf16.msra.mxu0 0
        %592 = vmatprep.subr.bf16.mxu0 0
        %593 = vmatpush1.bf16.msra.mxu0 0
        %594 = vmatprep.subr.bf16.mxu0 0
        %595 = vmatpush1.bf16.msra.mxu0 0
        %596 = vmatprep.subr.bf16.mxu0 0
        %597 = vmatpush1.bf16.msra.mxu0 %v580
        %598 = vmatprep.subr.bf16.mxu0 0
        %599 = vmatpush2.bf16.msra.mxu0 0
        %600 = vmatprep.subr.bf16.mxu0 0
        %601 = vmatpush2.bf16.msra.mxu0 0
        %602 = vmatprep.subr.bf16.mxu0 0
        %603 = vmatpush2.bf16.msra.mxu0 0
        %604 = vmatprep.subr.bf16.mxu0 0
        %605 = vmatpush2.bf16.msra.mxu0 0
        %606 = vmatprep.subr.bf16.mxu0 0
        %607 = vmatpush2.bf16.msra.mxu0 0
        %608 = vmatprep.subr.bf16.mxu0 0
        %609 = vmatpush2.bf16.msra.mxu0 0
        %610 = vmatprep.subr.bf16.mxu0 0
        %611 = vmatpush2.bf16.msra.mxu0 0
        %612 = vmatprep.subr.bf16.mxu0 0
        %613 = vmatpush2.bf16.msra.mxu0 0
        %614 = vmatprep.mubr.bf16.mxu0 0
        %615 = vmatmul.mubr.bf16.gmra.mxu0 %v577
        %v616 = vpop.f32.mrf.mxu0
        %v617 = vadd.f32 0.0, %v616
        %v618 = vpop.f32.mrf.mxu0
        %v619 = vpop.f32.mrf.mxu0
        %v620 = vpop.f32.mrf.mxu0
        %621 = vdwg.mxu0
        %v622 = vadd.f32 %v570, %v617
        %v624 = vlaneseq
        %v625 = vshrl.u32 %v624, 7
        %v626 = vsub.s32 0, %v625
        %v627 = vrot.slane %v208, %v626
        %v629 = vadd.f32 %v622, %v627
        %vm630 = vcmask 254976
        %631 = vst.msk [vmem:[%s204] sm:$0x3] %vm630, %v629
        %s632 = scalar_lea.vmem %s178, 16 [#allocation2]
        %v633 = vld [vmem:[%s632] sm:$0x3]
        %v634 = vpack.c.bf16 %v633, %v633
        %v635 = vld [vmem:[#allocation5] sm:$0xf]
        %s636 = scalar_lea.vmem %s178, 18 [#allocation2]
        %v637 = vld [vmem:[%s636] sm:$0x3]
        %v638 = vpack.c.bf16 %v637, %v637
        %v639 = vld [vmem:[%s215] sm:$0xf]
        %v641 = vsel %vm217, %v638, 0
        %v644 = vsel %vm221, %v639, 0
        %646 = vmatprep.subr.bf16.mxu0 0
        %647 = vmatpush1.bf16.msra.mxu0 0
        %648 = vmatprep.subr.bf16.mxu0 0
        %649 = vmatpush1.bf16.msra.mxu0 0
        %650 = vmatprep.subr.bf16.mxu0 0
        %651 = vmatpush1.bf16.msra.mxu0 0
        %652 = vmatprep.subr.bf16.mxu0 0
        %653 = vmatpush1.bf16.msra.mxu0 0
        %654 = vmatprep.subr.bf16.mxu0 0
        %655 = vmatpush1.bf16.msra.mxu0 0
        %656 = vmatprep.subr.bf16.mxu0 0
        %657 = vmatpush1.bf16.msra.mxu0 0
        %658 = vmatprep.subr.bf16.mxu0 0
        %659 = vmatpush1.bf16.msra.mxu0 0
        %660 = vmatprep.subr.bf16.mxu0 0
        %661 = vmatpush1.bf16.msra.mxu0 %v644
        %662 = vmatprep.subr.bf16.mxu0 0
        %663 = vmatpush2.bf16.msra.mxu0 0
        %664 = vmatprep.subr.bf16.mxu0 0
        %665 = vmatpush2.bf16.msra.mxu0 0
        %666 = vmatprep.subr.bf16.mxu0 0
        %667 = vmatpush2.bf16.msra.mxu0 0
        %668 = vmatprep.subr.bf16.mxu0 0
        %669 = vmatpush2.bf16.msra.mxu0 0
        %670 = vmatprep.subr.bf16.mxu0 0
        %671 = vmatpush2.bf16.msra.mxu0 0
        %672 = vmatprep.subr.bf16.mxu0 0
        %673 = vmatpush2.bf16.msra.mxu0 0
        %674 = vmatprep.subr.bf16.mxu0 0
        %675 = vmatpush2.bf16.msra.mxu0 0
        %676 = vmatprep.subr.bf16.mxu0 0
        %677 = vmatpush2.bf16.msra.mxu0 0
        %678 = vmatprep.mubr.bf16.mxu0 0
        %679 = vmatmul.mubr.bf16.gmra.mxu0 %v641
        %v680 = vpop.f32.mrf.mxu0
        %v681 = vadd.f32 0.0, %v680
        %v682 = vpop.f32.mrf.mxu0
        %v683 = vpop.f32.mrf.mxu0
        %v684 = vpop.f32.mrf.mxu0
        %685 = vdwg.mxu0
        %v687 = vsel %vm217, %v634, 0
        %v690 = vsel %vm221, %v635, 0
        %692 = vmatprep.subr.bf16.mxu0 0
        %693 = vmatpush1.bf16.msra.mxu0 0
        %694 = vmatprep.subr.bf16.mxu0 0
        %695 = vmatpush1.bf16.msra.mxu0 0
        %696 = vmatprep.subr.bf16.mxu0 0
        %697 = vmatpush1.bf16.msra.mxu0 0
        %698 = vmatprep.subr.bf16.mxu0 0
        %699 = vmatpush1.bf16.msra.mxu0 0
        %700 = vmatprep.subr.bf16.mxu0 0
        %701 = vmatpush1.bf16.msra.mxu0 0
        %702 = vmatprep.subr.bf16.mxu0 0
        %703 = vmatpush1.bf16.msra.mxu0 0
        %704 = vmatprep.subr.bf16.mxu0 0
        %705 = vmatpush1.bf16.msra.mxu0 0
        %706 = vmatprep.subr.bf16.mxu0 0
        %707 = vmatpush1.bf16.msra.mxu0 %v690
        %708 = vmatprep.subr.bf16.mxu0 0
        %709 = vmatpush2.bf16.msra.mxu0 0
        %710 = vmatprep.subr.bf16.mxu0 0
        %711 = vmatpush2.bf16.msra.mxu0 0
        %712 = vmatprep.subr.bf16.mxu0 0
        %713 = vmatpush2.bf16.msra.mxu0 0
        %714 = vmatprep.subr.bf16.mxu0 0
        %715 = vmatpush2.bf16.msra.mxu0 0
        %716 = vmatprep.subr.bf16.mxu0 0
        %717 = vmatpush2.bf16.msra.mxu0 0
        %718 = vmatprep.subr.bf16.mxu0 0
        %719 = vmatpush2.bf16.msra.mxu0 0
        %720 = vmatprep.subr.bf16.mxu0 0
        %721 = vmatpush2.bf16.msra.mxu0 0
        %722 = vmatprep.subr.bf16.mxu0 0
        %723 = vmatpush2.bf16.msra.mxu0 0
        %724 = vmatprep.mubr.bf16.mxu0 0
        %725 = vmatmul.mubr.bf16.gmra.mxu0 %v687
        %v726 = vpop.f32.mrf.mxu0
        %v727 = vadd.f32 %v681, %v726
        %v728 = vpop.f32.mrf.mxu0
        %v729 = vpop.f32.mrf.mxu0
        %v730 = vpop.f32.mrf.mxu0
        %731 = vdwg.mxu0
        %s732 = scalar_lea.vmem %s178, 20 [#allocation2]
        %v733 = vld [vmem:[%s732] sm:$0x3]
        %v734 = vpack.c.bf16 %v733, %v733
        %v735 = vld [vmem:[%s314] sm:$0xf]
        %v737 = vsel %vm217, %v734, 0
        %v740 = vsel %vm221, %v735, 0
        %742 = vmatprep.subr.bf16.mxu0 0
        %743 = vmatpush1.bf16.msra.mxu0 0
        %744 = vmatprep.subr.bf16.mxu0 0
        %745 = vmatpush1.bf16.msra.mxu0 0
        %746 = vmatprep.subr.bf16.mxu0 0
        %747 = vmatpush1.bf16.msra.mxu0 0
        %748 = vmatprep.subr.bf16.mxu0 0
        %749 = vmatpush1.bf16.msra.mxu0 0
        %750 = vmatprep.subr.bf16.mxu0 0
        %751 = vmatpush1.bf16.msra.mxu0 0
        %752 = vmatprep.subr.bf16.mxu0 0
        %753 = vmatpush1.bf16.msra.mxu0 0
        %754 = vmatprep.subr.bf16.mxu0 0
        %755 = vmatpush1.bf16.msra.mxu0 0
        %756 = vmatprep.subr.bf16.mxu0 0
        %757 = vmatpush1.bf16.msra.mxu0 %v740
        %758 = vmatprep.subr.bf16.mxu0 0
        %759 = vmatpush2.bf16.msra.mxu0 0
        %760 = vmatprep.subr.bf16.mxu0 0
        %761 = vmatpush2.bf16.msra.mxu0 0
        %762 = vmatprep.subr.bf16.mxu0 0
        %763 = vmatpush2.bf16.msra.mxu0 0
        %764 = vmatprep.subr.bf16.mxu0 0
        %765 = vmatpush2.bf16.msra.mxu0 0
        %766 = vmatprep.subr.bf16.mxu0 0
        %767 = vmatpush2.bf16.msra.mxu0 0
        %768 = vmatprep.subr.bf16.mxu0 0
        %769 = vmatpush2.bf16.msra.mxu0 0
        %770 = vmatprep.subr.bf16.mxu0 0
        %771 = vmatpush2.bf16.msra.mxu0 0
        %772 = vmatprep.subr.bf16.mxu0 0
        %773 = vmatpush2.bf16.msra.mxu0 0
        %774 = vmatprep.mubr.bf16.mxu0 0
        %775 = vmatmul.mubr.bf16.gmra.mxu0 %v737
        %v776 = vpop.f32.mrf.mxu0
        %v777 = vadd.f32 0.0, %v776
        %v778 = vpop.f32.mrf.mxu0
        %v779 = vpop.f32.mrf.mxu0
        %v780 = vpop.f32.mrf.mxu0
        %781 = vdwg.mxu0
        %v782 = vadd.f32 %v727, %v777
        %s783 = scalar_lea.vmem %s178, 22 [#allocation2]
        %v784 = vld [vmem:[%s783] sm:$0x3]
        %v785 = vpack.c.bf16 %v784, %v784
        %v786 = vld [vmem:[%s366] sm:$0xf]
        %v788 = vsel %vm217, %v785, 0
        %v791 = vsel %vm221, %v786, 0
        %793 = vmatprep.subr.bf16.mxu0 0
        %794 = vmatpush1.bf16.msra.mxu0 0
        %795 = vmatprep.subr.bf16.mxu0 0
        %796 = vmatpush1.bf16.msra.mxu0 0
        %797 = vmatprep.subr.bf16.mxu0 0
        %798 = vmatpush1.bf16.msra.mxu0 0
        %799 = vmatprep.subr.bf16.mxu0 0
        %800 = vmatpush1.bf16.msra.mxu0 0
        %801 = vmatprep.subr.bf16.mxu0 0
        %802 = vmatpush1.bf16.msra.mxu0 0
        %803 = vmatprep.subr.bf16.mxu0 0
        %804 = vmatpush1.bf16.msra.mxu0 0
        %805 = vmatprep.subr.bf16.mxu0 0
        %806 = vmatpush1.bf16.msra.mxu0 0
        %807 = vmatprep.subr.bf16.mxu0 0
        %808 = vmatpush1.bf16.msra.mxu0 %v791
        %809 = vmatprep.subr.bf16.mxu0 0
        %810 = vmatpush2.bf16.msra.mxu0 0
        %811 = vmatprep.subr.bf16.mxu0 0
        %812 = vmatpush2.bf16.msra.mxu0 0
        %813 = vmatprep.subr.bf16.mxu0 0
        %814 = vmatpush2.bf16.msra.mxu0 0
        %815 = vmatprep.subr.bf16.mxu0 0
        %816 = vmatpush2.bf16.msra.mxu0 0
        %817 = vmatprep.subr.bf16.mxu0 0
        %818 = vmatpush2.bf16.msra.mxu0 0
        %819 = vmatprep.subr.bf16.mxu0 0
        %820 = vmatpush2.bf16.msra.mxu0 0
        %821 = vmatprep.subr.bf16.mxu0 0
        %822 = vmatpush2.bf16.msra.mxu0 0
        %823 = vmatprep.subr.bf16.mxu0 0
        %824 = vmatpush2.bf16.msra.mxu0 0
        %825 = vmatprep.mubr.bf16.mxu0 0
        %826 = vmatmul.mubr.bf16.gmra.mxu0 %v788
        %v827 = vpop.f32.mrf.mxu0
        %v828 = vadd.f32 0.0, %v827
        %v829 = vpop.f32.mrf.mxu0
        %v830 = vpop.f32.mrf.mxu0
        %v831 = vpop.f32.mrf.mxu0
        %832 = vdwg.mxu0
        %v833 = vadd.f32 %v782, %v828
        %s834 = scalar_lea.vmem %s178, 24 [#allocation2]
        %v835 = vld [vmem:[%s834] sm:$0x3]
        %v836 = vpack.c.bf16 %v835, %v835
        %v837 = vld [vmem:[%s418] sm:$0xf]
        %v839 = vsel %vm217, %v836, 0
        %v842 = vsel %vm221, %v837, 0
        %844 = vmatprep.subr.bf16.mxu0 0
        %845 = vmatpush1.bf16.msra.mxu0 0
        %846 = vmatprep.subr.bf16.mxu0 0
        %847 = vmatpush1.bf16.msra.mxu0 0
        %848 = vmatprep.subr.bf16.mxu0 0
        %849 = vmatpush1.bf16.msra.mxu0 0
        %850 = vmatprep.subr.bf16.mxu0 0
        %851 = vmatpush1.bf16.msra.mxu0 0
        %852 = vmatprep.subr.bf16.mxu0 0
        %853 = vmatpush1.bf16.msra.mxu0 0
        %854 = vmatprep.subr.bf16.mxu0 0
        %855 = vmatpush1.bf16.msra.mxu0 0
        %856 = vmatprep.subr.bf16.mxu0 0
        %857 = vmatpush1.bf16.msra.mxu0 0
        %858 = vmatprep.subr.bf16.mxu0 0
        %859 = vmatpush1.bf16.msra.mxu0 %v842
        %860 = vmatprep.subr.bf16.mxu0 0
        %861 = vmatpush2.bf16.msra.mxu0 0
        %862 = vmatprep.subr.bf16.mxu0 0
        %863 = vmatpush2.bf16.msra.mxu0 0
        %864 = vmatprep.subr.bf16.mxu0 0
        %865 = vmatpush2.bf16.msra.mxu0 0
        %866 = vmatprep.subr.bf16.mxu0 0
        %867 = vmatpush2.bf16.msra.mxu0 0
        %868 = vmatprep.subr.bf16.mxu0 0
        %869 = vmatpush2.bf16.msra.mxu0 0
        %870 = vmatprep.subr.bf16.mxu0 0
        %871 = vmatpush2.bf16.msra.mxu0 0
        %872 = vmatprep.subr.bf16.mxu0 0
        %873 = vmatpush2.bf16.msra.mxu0 0
        %874 = vmatprep.subr.bf16.mxu0 0
        %875 = vmatpush2.bf16.msra.mxu0 0
        %876 = vmatprep.mubr.bf16.mxu0 0
        %877 = vmatmul.mubr.bf16.gmra.mxu0 %v839
        %v878 = vpop.f32.mrf.mxu0
        %v879 = vadd.f32 0.0, %v878
        %v880 = vpop.f32.mrf.mxu0
        %v881 = vpop.f32.mrf.mxu0
        %v882 = vpop.f32.mrf.mxu0
        %883 = vdwg.mxu0
        %v884 = vadd.f32 %v833, %v879
        %s885 = scalar_lea.vmem %s178, 26 [#allocation2]
        %v886 = vld [vmem:[%s885] sm:$0x3]
        %v887 = vpack.c.bf16 %v886, %v886
        %v888 = vld [vmem:[%s470] sm:$0xf]
        %v890 = vsel %vm217, %v887, 0
        %v893 = vsel %vm221, %v888, 0
        %895 = vmatprep.subr.bf16.mxu0 0
        %896 = vmatpush1.bf16.msra.mxu0 0
        %897 = vmatprep.subr.bf16.mxu0 0
        %898 = vmatpush1.bf16.msra.mxu0 0
        %899 = vmatprep.subr.bf16.mxu0 0
        %900 = vmatpush1.bf16.msra.mxu0 0
        %901 = vmatprep.subr.bf16.mxu0 0
        %902 = vmatpush1.bf16.msra.mxu0 0
        %903 = vmatprep.subr.bf16.mxu0 0
        %904 = vmatpush1.bf16.msra.mxu0 0
        %905 = vmatprep.subr.bf16.mxu0 0
        %906 = vmatpush1.bf16.msra.mxu0 0
        %907 = vmatprep.subr.bf16.mxu0 0
        %908 = vmatpush1.bf16.msra.mxu0 0
        %909 = vmatprep.subr.bf16.mxu0 0
        %910 = vmatpush1.bf16.msra.mxu0 %v893
        %911 = vmatprep.subr.bf16.mxu0 0
        %912 = vmatpush2.bf16.msra.mxu0 0
        %913 = vmatprep.subr.bf16.mxu0 0
        %914 = vmatpush2.bf16.msra.mxu0 0
        %915 = vmatprep.subr.bf16.mxu0 0
        %916 = vmatpush2.bf16.msra.mxu0 0
        %917 = vmatprep.subr.bf16.mxu0 0
        %918 = vmatpush2.bf16.msra.mxu0 0
        %919 = vmatprep.subr.bf16.mxu0 0
        %920 = vmatpush2.bf16.msra.mxu0 0
        %921 = vmatprep.subr.bf16.mxu0 0
        %922 = vmatpush2.bf16.msra.mxu0 0
        %923 = vmatprep.subr.bf16.mxu0 0
        %924 = vmatpush2.bf16.msra.mxu0 0
        %925 = vmatprep.subr.bf16.mxu0 0
        %926 = vmatpush2.bf16.msra.mxu0 0
        %927 = vmatprep.mubr.bf16.mxu0 0
        %928 = vmatmul.mubr.bf16.gmra.mxu0 %v890
        %v929 = vpop.f32.mrf.mxu0
        %v930 = vadd.f32 0.0, %v929
        %v931 = vpop.f32.mrf.mxu0
        %v932 = vpop.f32.mrf.mxu0
        %v933 = vpop.f32.mrf.mxu0
        %934 = vdwg.mxu0
        %v935 = vadd.f32 %v884, %v930
        %s936 = scalar_lea.vmem %s178, 28 [#allocation2]
        %v937 = vld [vmem:[%s936] sm:$0x3]
        %v938 = vpack.c.bf16 %v937, %v937
        %v939 = vld [vmem:[%s522] sm:$0xf]
        %v941 = vsel %vm217, %v938, 0
        %v944 = vsel %vm221, %v939, 0
        %946 = vmatprep.subr.bf16.mxu0 0
        %947 = vmatpush1.bf16.msra.mxu0 0
        %948 = vmatprep.subr.bf16.mxu0 0
        %949 = vmatpush1.bf16.msra.mxu0 0
        %950 = vmatprep.subr.bf16.mxu0 0
        %951 = vmatpush1.bf16.msra.mxu0 0
        %952 = vmatprep.subr.bf16.mxu0 0
        %953 = vmatpush1.bf16.msra.mxu0 0
        %954 = vmatprep.subr.bf16.mxu0 0
        %955 = vmatpush1.bf16.msra.mxu0 0
        %956 = vmatprep.subr.bf16.mxu0 0
        %957 = vmatpush1.bf16.msra.mxu0 0
        %958 = vmatprep.subr.bf16.mxu0 0
        %959 = vmatpush1.bf16.msra.mxu0 0
        %960 = vmatprep.subr.bf16.mxu0 0
        %961 = vmatpush1.bf16.msra.mxu0 %v944
        %962 = vmatprep.subr.bf16.mxu0 0
        %963 = vmatpush2.bf16.msra.mxu0 0
        %964 = vmatprep.subr.bf16.mxu0 0
        %965 = vmatpush2.bf16.msra.mxu0 0
        %966 = vmatprep.subr.bf16.mxu0 0
        %967 = vmatpush2.bf16.msra.mxu0 0
        %968 = vmatprep.subr.bf16.mxu0 0
        %969 = vmatpush2.bf16.msra.mxu0 0
        %970 = vmatprep.subr.bf16.mxu0 0
        %971 = vmatpush2.bf16.msra.mxu0 0
        %972 = vmatprep.subr.bf16.mxu0 0
        %973 = vmatpush2.bf16.msra.mxu0 0
        %974 = vmatprep.subr.bf16.mxu0 0
        %975 = vmatpush2.bf16.msra.mxu0 0
        %976 = vmatprep.subr.bf16.mxu0 0
        %977 = vmatpush2.bf16.msra.mxu0 0
        %978 = vmatprep.mubr.bf16.mxu0 0
        %979 = vmatmul.mubr.bf16.gmra.mxu0 %v941
        %v980 = vpop.f32.mrf.mxu0
        %v981 = vadd.f32 0.0, %v980
        %v982 = vpop.f32.mrf.mxu0
        %v983 = vpop.f32.mrf.mxu0
        %v984 = vpop.f32.mrf.mxu0
        %985 = vdwg.mxu0
        %v986 = vadd.f32 %v935, %v981
        %s987 = scalar_lea.vmem %s178, 30 [#allocation2]
        %v988 = vld [vmem:[%s987] sm:$0x3]
        %v989 = vpack.c.bf16 %v988, %v988
        %v990 = vld [vmem:[%s574] sm:$0xf]
        %v992 = vsel %vm217, %v989, 0
        %v995 = vsel %vm221, %v990, 0
        %997 = vmatprep.subr.bf16.mxu0 0
        %998 = vmatpush1.bf16.msra.mxu0 0
        %999 = vmatprep.subr.bf16.mxu0 0
        %1000 = vmatpush1.bf16.msra.mxu0 0
        %1001 = vmatprep.subr.bf16.mxu0 0
        %1002 = vmatpush1.bf16.msra.mxu0 0
        %1003 = vmatprep.subr.bf16.mxu0 0
        %1004 = vmatpush1.bf16.msra.mxu0 0
        %1005 = vmatprep.subr.bf16.mxu0 0
        %1006 = vmatpush1.bf16.msra.mxu0 0
        %1007 = vmatprep.subr.bf16.mxu0 0
        %1008 = vmatpush1.bf16.msra.mxu0 0
        %1009 = vmatprep.subr.bf16.mxu0 0
        %1010 = vmatpush1.bf16.msra.mxu0 0
        %1011 = vmatprep.subr.bf16.mxu0 0
        %1012 = vmatpush1.bf16.msra.mxu0 %v995
        %1013 = vmatprep.subr.bf16.mxu0 0
        %1014 = vmatpush2.bf16.msra.mxu0 0
        %1015 = vmatprep.subr.bf16.mxu0 0
        %1016 = vmatpush2.bf16.msra.mxu0 0
        %1017 = vmatprep.subr.bf16.mxu0 0
        %1018 = vmatpush2.bf16.msra.mxu0 0
        %1019 = vmatprep.subr.bf16.mxu0 0
        %1020 = vmatpush2.bf16.msra.mxu0 0
        %1021 = vmatprep.subr.bf16.mxu0 0
        %1022 = vmatpush2.bf16.msra.mxu0 0
        %1023 = vmatprep.subr.bf16.mxu0 0
        %1024 = vmatpush2.bf16.msra.mxu0 0
        %1025 = vmatprep.subr.bf16.mxu0 0
        %1026 = vmatpush2.bf16.msra.mxu0 0
        %1027 = vmatprep.subr.bf16.mxu0 0
        %1028 = vmatpush2.bf16.msra.mxu0 0
        %1029 = vmatprep.mubr.bf16.mxu0 0
        %1030 = vmatmul.mubr.bf16.gmra.mxu0 %v992
        %v1031 = vpop.f32.mrf.mxu0
        %v1032 = vadd.f32 0.0, %v1031
        %v1033 = vpop.f32.mrf.mxu0
        %v1034 = vpop.f32.mrf.mxu0
        %v1035 = vpop.f32.mrf.mxu0
        %1036 = vdwg.mxu0
        %v1037 = vadd.f32 %v986, %v1032
        %v1038 = vadd.f32 %v1037, %v627
        %s1039 = scalar_lea.vmem %s204, 2 [#allocation7]
        %1040 = vst.msk [vmem:[%s1039] sm:$0x3] %vm630, %v1038
        %s1041 = sand.u32 %s97, 1
        %s1042 = scalar_lea.sflag [#allocation4], %s1041
        %s1043 = sand.u32 %s97, 1
        %s1044 = smul.addr %s1043, 4
        %s1045 = scalar_lea.vmem [#allocation7], %s1044
        // Predicated region
        $region41: #{tpu_custom_call.1} parent=31 // pred_check
          %p1046 = pneg %p107
        $region42: #{tpu_custom_call.1} parent=31 // pred_check_branch
          %1048 = sbr.rel (%p1046) target = $region44
        $region43: #{tpu_custom_call.1} parent=31 // pred_region
          %s1049 = smul.u32 2, %s21
          %s1051 = ssub.s32 64, 64
          %1052 = vsyncadd %s1042, %s1051
          %s1053 = smul.addr %s1049, 32
          %s1054 = scalar_lea.hbm %s3, %s1053
          %s1055 = sshll.u32 %s1045, 4
          %s1056 = int_to_ptr.vmem [resolvable:$true] %s1055
          %1061 = dma.vmem_to_hbm [thread:$0]  %s1056, 64, %s1054, %s1042, 32, 32, 2
        $region44: #{tpu_custom_call.1} parent=31 // pred_fallthru
          _
      $region32: #{tpu_custom_call.1} parent=5 // pred_fallthru
        _
      %p1062 = scmp.le.s32.totalorder 2, %s16
      // Predicated region
      $region45: #{tpu_custom_call.1} parent=5 // pred_check
        %p1063 = pneg %p1062
      $region46: #{tpu_custom_call.1} parent=5 // pred_check_branch
        %1065 = sbr.rel (%p1063) target = $region48
      $region47: #{tpu_custom_call.1} parent=5 // pred_region
        %s1066 = ssub.s32 %s16, 2
        // Predicated region
        $region49: #{tpu_custom_call.1} parent=47 // pred_check
          %p1067 = pneg %p113
        $region50: #{tpu_custom_call.1} parent=47 // pred_check_branch
          %1069 = sbr.rel (%p1067) target = $region52
        $region51: #{tpu_custom_call.1} parent=47 // pred_region
          %s1070 = sand.u32 %s98, 1
          %s1071 = scalar_lea.sflag [#allocation4], %s1070
          %s1072 = sand.u32 %s98, 1
          %s1073 = smul.addr %s1072, 4
          %s1074 = scalar_lea.vmem [#allocation7], %s1073
          %1075 = dma.done %s1071, 64
        $region52: #{tpu_custom_call.1} parent=47 // pred_fallthru
          _
      $region48: #{tpu_custom_call.1} parent=5 // pred_fallthru
        _
    $region6: #{tpu_custom_call.1} parent=1 // loop_footer
      %s20 = sadd.s32 1, %s16
    $region7: #{tpu_custom_call.1} parent=1 // loop_footer_branch
      %15 = sbr.rel target = $region3
    $region8: #{tpu_custom_call.1} parent=1 // loop_exit
      _
    %1076 = vsyncpa [#allocation3], 1
    %s1077 = scalar_lea.sflag [#allocation3], 1
    %1078 = vsyncpa %s1077, 1
    %1079 = vsyncpa [#allocation6], 1
    %1080 = vsyncpa [#allocation4], 1
    %s1081 = scalar_lea.sflag [#allocation4], 1
    %1082 = vsyncpa %s1081, 1

</llo_original>
